<compile_context>
chip_gen: v6e
topology: v6e:2x2x1
jax: 0.10.0
libtpu: 0.0.40
codegen_flags: <defaults>
</compile_context>

<pallas_src>
import jax
import jax.numpy as jnp
from jax.experimental import pallas as pl
from jax.experimental.pallas import tpu as pltpu


def mlp_kernel(x_ref, w1t_ref, b1_ref, w2t_ref, b2_ref, wd_ref, bd_ref, o_ref):
    x = x_ref[...]                                    # (TB, 2)  batch on sublanes
    w1t = w1t_ref[...]                                # (2, H1)  = w1.T

    # Linear(2, H1) + ReLU -- K=2 contraction as two VPU FMAs (skip the MXU).
    h1 = x[:, 0:1] * w1t[0:1, :] + x[:, 1:2] * w1t[1:2, :] + b1_ref[...]
    h1 = jnp.maximum(h1, 0.0)                         # (TB, H1)

    # Linear(H1, H2) on the MXU + Tanh (EUP).
    h2 = jnp.tanh(
        jnp.dot(h1, w2t_ref[...], preferred_element_type=jnp.float32)
        + b2_ref[...]
    )                                                 # (TB, H2)

    # Layer 3 + 2-class softmax folded into a logit-difference sigmoid:
    #   d  = (w3[1]-w3[0]) . h2 + (b3[1]-b3[0])
    #   p1 = sigmoid(d), p0 = 1 - p1        (sums to 1 exactly)
    d = jnp.sum(h2 * wd_ref[...], axis=1, keepdims=True) + bd_ref[...]   # (TB, 1)
    p1 = 1.0 / (1.0 + jnp.exp(-d))
    o_ref[:, 0:1] = (1.0 - p1).astype(o_ref.dtype)
    o_ref[:, 1:2] = p1.astype(o_ref.dtype)


def _round_up(x, m):
    return ((x + m - 1) // m) * m


def _resident(shape):
    # Full-array block, constant index_map -> DMA'd once, stays in VMEM.
    return pl.BlockSpec(shape, lambda i: (0, 0))


def net_forward(x, packed, tile_b=4096):
    """x: (B, 2) f32.  Returns (B, 2) softmax probabilities."""
    B, F = x.shape

    # Tile choice: multiple of 8 (sublanes), >= 2 grid steps once the batch is
    # big enough (uses both TensorCores on v7x), capped at tile_b, and never
    # larger than the 8-aligned batch itself.
    half = _round_up((B + 1) // 2, 128)
    tb = max(8, min(min(tile_b, half), _round_up(B, 8)))
    Bp = _round_up(B, tb)
    if Bp != B:
        x = jnp.pad(x, ((0, Bp - B), (0, 0)))        # zero-pad remainder rows only

    out = pl.pallas_call(
        mlp_kernel,
        out_shape=jax.ShapeDtypeStruct((Bp, 2), jnp.float32),
        grid=(Bp // tb,),
        in_specs=[
            pl.BlockSpec((tb, F), lambda i: (i, 0)),   # x tile, native layout
            _resident(packed["w1t"].shape),
            _resident(packed["b1"].shape),
            _resident(packed["w2t"].shape),
            _resident(packed["b2"].shape),
            _resident(packed["wd"].shape),
            _resident(packed["bd"].shape),
        ],
        out_specs=pl.BlockSpec((tb, 2), lambda i: (i, 0)),
        compiler_params=pltpu.CompilerParams(
            dimension_semantics=("parallel",),         # shards grid across 2 TCs on v7x
        ),
    )(x, packed["w1t"], packed["b1"], packed["w2t"], packed["b2"],
      packed["wd"], packed["bd"])

    return out[:B] if Bp != B else out


def init_params(key, spec_string, in_features=2, out_classes=2):
    """Deterministic init mimicking nn.Linear default (uniform +-1/sqrt(fan_in)).

    Weights stored torch-style as (out, in); biases as (out,).
    """
    dims = [in_features]
    for s in spec_string:
        try:
            dims.append(int(s))
        except ValueError:
            pass  # activations carry no params
    dims.append(out_classes)

    params = {}
    for i in range(len(dims) - 1):
        key, kw, kb = jax.random.split(key, 3)
        fan_in, fan_out = dims[i], dims[i + 1]
        bound = 1.0 / float(fan_in) ** 0.5
        params[f"w{i+1}"] = jax.random.uniform(
            kw, (fan_out, fan_in), jnp.float32, -bound, bound)
        params[f"b{i+1}"] = jax.random.uniform(
            kb, (fan_out,), jnp.float32, -bound, bound)
    return params


def pack_params(params):
    """Pre-pack torch-style params into the kernel's resident operand layout."""
    return dict(
        w1t=params["w1"].T,                                  # (2, H1)
        b1=params["b1"][None, :],                            # (1, H1)
        w2t=params["w2"].T,                                  # (H1, H2)
        b2=params["b2"][None, :],                            # (1, H2)
        wd=(params["w3"][1] - params["w3"][0])[None, :],     # (1, H2) logit-diff weights
        bd=jnp.reshape(params["b3"][1] - params["b3"][0], (1, 1)),
    )


def reference_forward(x, params):
    h1 = jnp.maximum(x @ params["w1"].T + params["b1"], 0.0)
    h2 = jnp.tanh(h1 @ params["w2"].T + params["b2"])
    logits = h2 @ params["w3"].T + params["b3"]
    return jax.nn.softmax(logits, axis=-1)


if __name__ == "__main__":
    spec_string = ["32", "ReLU", "32", "Tanh"]
    key = jax.random.PRNGKey(0)
    key_params, key_x1, key_x2 = jax.random.split(key, 3)

    params = init_params(key_params, spec_string)
    packed = pack_params(params)

    # Test 1: the module's DataLoader batch size (32, 2) -- single grid step.
    x1 = jax.random.normal(key_x1, (32, 2), dtype=jnp.float32)
    out1 = jax.block_until_ready(net_forward(x1, packed))
    ref1 = reference_forward(x1, params)
    assert out1.shape == (32, 2)
    assert jnp.allclose(out1, ref1, atol=2e-3, rtol=2e-3), "mismatch vs JAX reference"
    assert jnp.allclose(jnp.sum(out1, axis=-1), 1.0, atol=1e-5), "softmax rows must sum to ~1"

    # Test 2: batch not a multiple of the tile -> 2-step grid + pad/slice path.
    x2 = jax.random.normal(key_x2, (300, 2), dtype=jnp.float32)
    out2 = jax.block_until_ready(net_forward(x2, packed))
    ref2 = reference_forward(x2, params)
    assert out2.shape == (300, 2)
    assert jnp.allclose(out2, ref2, atol=2e-3, rtol=2e-3), "mismatch vs JAX reference (tiled)"
    assert jnp.allclose(jnp.sum(out2, axis=-1), 1.0, atol=1e-5), "softmax rows must sum to ~1"

    print("KERNEL_OK")
</pallas_src>

<mosaic_0001>
module attributes {stable_mosaic.version = 11 : i64} {
  func.func @mlp_kernel(%arg0: i32, %arg1: memref<32x2xf32, #tpu.memory_space<vmem>>, %arg2: memref<2x32xf32, #tpu.memory_space<vmem>>, %arg3: memref<1x32xf32, #tpu.memory_space<vmem>>, %arg4: memref<32x32xf32, #tpu.memory_space<vmem>>, %arg5: memref<1x32xf32, #tpu.memory_space<vmem>>, %arg6: memref<1x32xf32, #tpu.memory_space<vmem>>, %arg7: memref<1x1xf32, #tpu.memory_space<vmem>>, %arg8: memref<32x2xf32, #tpu.memory_space<vmem>>) attributes {dimension_semantics = [#tpu.dimension_semantics<parallel>], iteration_bounds = array<i64: 1>, scalar_prefetch = 0 : i64, scratch_operands = 0 : i64, tpu.core_type = #tpu.core_type<tc>, window_params = [{transform_indices = @transform_0, window_bounds = array<i64: 32, 2>}, {pipeline_mode = #tpu.pipeline_mode<synchronous>, transform_indices = @transform_1, window_bounds = array<i64: 2, 32>}, {pipeline_mode = #tpu.pipeline_mode<synchronous>, transform_indices = @transform_2, window_bounds = array<i64: 1, 32>}, {pipeline_mode = #tpu.pipeline_mode<synchronous>, transform_indices = @transform_3, window_bounds = array<i64: 32, 32>}, {pipeline_mode = #tpu.pipeline_mode<synchronous>, transform_indices = @transform_4, window_bounds = array<i64: 1, 32>}, {pipeline_mode = #tpu.pipeline_mode<synchronous>, transform_indices = @transform_5, window_bounds = array<i64: 1, 32>}, {pipeline_mode = #tpu.pipeline_mode<synchronous>, transform_indices = @transform_6, window_bounds = array<i64: 1, 1>}, {transform_indices = @transform_7, window_bounds = array<i64: 32, 2>}]} {
    %c0 = arith.constant 0 : index
    %c0_0 = arith.constant 0 : index
    %0 = vector.load %arg1[%c0, %c0_0] : memref<32x2xf32, #tpu.memory_space<vmem>>, vector<32x2xf32>
    %c0_1 = arith.constant 0 : index
    %c0_2 = arith.constant 0 : index
    %1 = vector.load %arg2[%c0_1, %c0_2] : memref<2x32xf32, #tpu.memory_space<vmem>>, vector<2x32xf32>
    %2 = vector.extract_strided_slice %0 {offsets = [0, 0], sizes = [32, 1], strides = [1, 1]} : vector<32x2xf32> to vector<32x1xf32>
    %3 = vector.extract_strided_slice %1 {offsets = [0, 0], sizes = [1, 32], strides = [1, 1]} : vector<2x32xf32> to vector<1x32xf32>
    %4 = vector.broadcast %2 : vector<32x1xf32> to vector<32x32xf32>
    %5 = vector.broadcast %3 : vector<1x32xf32> to vector<32x32xf32>
    %6 = arith.mulf %4, %5 : vector<32x32xf32>
    %7 = vector.extract_strided_slice %0 {offsets = [0, 1], sizes = [32, 1], strides = [1, 1]} : vector<32x2xf32> to vector<32x1xf32>
    %8 = vector.extract_strided_slice %1 {offsets = [1, 0], sizes = [1, 32], strides = [1, 1]} : vector<2x32xf32> to vector<1x32xf32>
    %9 = vector.broadcast %7 : vector<32x1xf32> to vector<32x32xf32>
    %10 = vector.broadcast %8 : vector<1x32xf32> to vector<32x32xf32>
    %11 = arith.mulf %9, %10 : vector<32x32xf32>
    %12 = arith.addf %6, %11 : vector<32x32xf32>
    %c0_3 = arith.constant 0 : index
    %c0_4 = arith.constant 0 : index
    %13 = vector.load %arg3[%c0_3, %c0_4] : memref<1x32xf32, #tpu.memory_space<vmem>>, vector<1x32xf32>
    %14 = vector.broadcast %13 : vector<1x32xf32> to vector<32x32xf32>
    %15 = arith.addf %12, %14 : vector<32x32xf32>
    %cst = arith.constant 0.000000e+00 : f32
    %16 = vector.broadcast %cst : f32 to vector<32x32xf32>
    %17 = arith.maximumf %15, %16 : vector<32x32xf32>
    %c0_5 = arith.constant 0 : index
    %c0_6 = arith.constant 0 : index
    %18 = vector.load %arg4[%c0_5, %c0_6] : memref<32x32xf32, #tpu.memory_space<vmem>>, vector<32x32xf32>
    %cst_7 = arith.constant dense<0.000000e+00> : vector<32x32xf32>
    %19 = tpu.matmul %17, %18, %cst_7 {dimension_numbers = #tpu.dot_dimension_numbers<[1], [0], [0], [1], [0, 0, 1, 1], [], []>} : vector<32x32xf32>, vector<32x32xf32>, vector<32x32xf32> -> vector<32x32xf32>
    %c0_8 = arith.constant 0 : index
    %c0_9 = arith.constant 0 : index
    %20 = vector.load %arg5[%c0_8, %c0_9] : memref<1x32xf32, #tpu.memory_space<vmem>>, vector<1x32xf32>
    %21 = vector.broadcast %20 : vector<1x32xf32> to vector<32x32xf32>
    %22 = arith.addf %19, %21 : vector<32x32xf32>
    %23 = math.tanh %22 : vector<32x32xf32>
    %c0_10 = arith.constant 0 : index
    %c0_11 = arith.constant 0 : index
    %24 = vector.load %arg6[%c0_10, %c0_11] : memref<1x32xf32, #tpu.memory_space<vmem>>, vector<1x32xf32>
    %25 = vector.broadcast %24 : vector<1x32xf32> to vector<32x32xf32>
    %26 = arith.mulf %23, %25 : vector<32x32xf32>
    %cst_12 = arith.constant dense<0.000000e+00> : vector<32xf32>
    %27 = vector.multi_reduction <add>, %26, %cst_12 [1] : vector<32x32xf32> to vector<32xf32>
    %28 = vector.shape_cast %27 : vector<32xf32> to vector<32x1xf32>
    %c0_13 = arith.constant 0 : index
    %c0_14 = arith.constant 0 : index
    %29 = vector.load %arg7[%c0_13, %c0_14] : memref<1x1xf32, #tpu.memory_space<vmem>>, vector<1x1xf32>
    %30 = vector.broadcast %29 : vector<1x1xf32> to vector<32x1xf32>
    %31 = arith.addf %28, %30 : vector<32x1xf32>
    %cst_15 = arith.constant 0.000000e+00 : f32
    %32 = vector.broadcast %cst_15 : f32 to vector<32x1xf32>
    %33 = arith.subf %32, %31 : vector<32x1xf32>
    %34 = math.exp %33 : vector<32x1xf32>
    %cst_16 = arith.constant 1.000000e+00 : f32
    %35 = vector.broadcast %cst_16 : f32 to vector<32x1xf32>
    %36 = arith.addf %35, %34 : vector<32x1xf32>
    %cst_17 = arith.constant 1.000000e+00 : f32
    %37 = vector.broadcast %cst_17 : f32 to vector<32x1xf32>
    %38 = arith.divf %37, %36 : vector<32x1xf32>
    %cst_18 = arith.constant 1.000000e+00 : f32
    %39 = vector.broadcast %cst_18 : f32 to vector<32x1xf32>
    %40 = arith.subf %39, %38 : vector<32x1xf32>
    %c0_19 = arith.constant 0 : index
    %c0_20 = arith.constant 0 : index
    %41 = vector.load %arg8[%c0_19, %c0_20] : memref<32x2xf32, #tpu.memory_space<vmem>>, vector<32x1xf32>
    tpu.vector_store %arg8[%c0_19, %c0_20], %40 {strides = array<i32>} : memref<32x2xf32, #tpu.memory_space<vmem>>, vector<32x1xf32>,
    %c0_21 = arith.constant 0 : index
    %c1 = arith.constant 1 : index
    %42 = vector.load %arg8[%c0_21, %c1] : memref<32x2xf32, #tpu.memory_space<vmem>>, vector<32x1xf32>
    tpu.vector_store %arg8[%c0_21, %c1], %38 {strides = array<i32>} : memref<32x2xf32, #tpu.memory_space<vmem>>, vector<32x1xf32>,
    return
  }
  func.func @transform_0(%arg0: i32) -> (i32, i32) {
    %c0_i32 = arith.constant 0 : i32
    %c0_i32_0 = arith.constant 0 : i32
    return %arg0, %c0_i32 : i32, i32
  }
  func.func @transform_1(%arg0: i32) -> (i32, i32) {
    %c0_i32 = arith.constant 0 : i32
    %c0_i32_0 = arith.constant 0 : i32
    %c0_i32_1 = arith.constant 0 : i32
    return %c0_i32, %c0_i32_0 : i32, i32
  }
  func.func @transform_2(%arg0: i32) -> (i32, i32) {
    %c0_i32 = arith.constant 0 : i32
    %c0_i32_0 = arith.constant 0 : i32
    %c0_i32_1 = arith.constant 0 : i32
    return %c0_i32, %c0_i32_0 : i32, i32
  }
  func.func @transform_3(%arg0: i32) -> (i32, i32) {
    %c0_i32 = arith.constant 0 : i32
    %c0_i32_0 = arith.constant 0 : i32
    %c0_i32_1 = arith.constant 0 : i32
    return %c0_i32, %c0_i32_0 : i32, i32
  }
  func.func @transform_4(%arg0: i32) -> (i32, i32) {
    %c0_i32 = arith.constant 0 : i32
    %c0_i32_0 = arith.constant 0 : i32
    %c0_i32_1 = arith.constant 0 : i32
    return %c0_i32, %c0_i32_0 : i32, i32
  }
  func.func @transform_5(%arg0: i32) -> (i32, i32) {
    %c0_i32 = arith.constant 0 : i32
    %c0_i32_0 = arith.constant 0 : i32
    %c0_i32_1 = arith.constant 0 : i32
    return %c0_i32, %c0_i32_0 : i32, i32
  }
  func.func @transform_6(%arg0: i32) -> (i32, i32) {
    %c0_i32 = arith.constant 0 : i32
    %c0_i32_0 = arith.constant 0 : i32
    %c0_i32_1 = arith.constant 0 : i32
    return %c0_i32, %c0_i32_0 : i32, i32
  }
  func.func @transform_7(%arg0: i32) -> (i32, i32) {
    %c0_i32 = arith.constant 0 : i32
    %c0_i32_0 = arith.constant 0 : i32
    return %arg0, %c0_i32 : i32, i32
  }
}

</mosaic_0001>

<llo_original>
// kernel: tpu_custom_call.1
$region0: #{tpu_custom_call.1}
  #allocation0 [shape = 'u32[]', space=smem, size = 0x4, offset = 0x4, fixed_abs, tag = 'smem constant byte address 0x4 - core index']
  #allocation1 [shape = 'u32[144,128]{1,0:T(1,128)}', space=vmem, size = 0x12000, scoped, tag = 'internal scratch']
  #allocation2 [shape = 'f32[1,1]{1,0:T(1,128)S(1)}', space=vmem, size = 0x200, scoped, tag = 'scoped memory for tpu_custom_call.1']
  %s0 = inlined_call_operand.vmem [shape: f32[32,2], index: 0, kind: input, shape index: {}]
  %s1 = inlined_call_operand.vmem [shape: f32[2,32], index: 1, kind: input, shape index: {}]
  %s2 = inlined_call_operand.vmem [shape: f32[1,32], index: 2, kind: input, shape index: {}]
  %s3 = inlined_call_operand.vmem [shape: f32[32,32], index: 3, kind: input, shape index: {}]
  %s4 = inlined_call_operand.vmem [shape: f32[1,32], index: 4, kind: input, shape index: {}]
  %s5 = inlined_call_operand.vmem [shape: f32[1,32], index: 5, kind: input, shape index: {}]
  %s6 = inlined_call_operand.<no memory space> [shape: f32[1,1], index: 6, kind: input, shape index: {}]
  %s7 = inlined_call_operand.vmem [shape: f32[32,2], index: 7, kind: output, shape index: {}]
  %s8 = sld [smem:[#allocation0]]
  $region38: #{tpu_custom_call.1} parent=0
    _
  %s10 = ssub.s32 1, %s8
  %s11 = scalar_select 0, %s10, %s8
  %v12 = vstv %s6
  %13 = vst [vmem:[#allocation2] sm:$0x1] %v12
  // Predicated region
  $region2: #{tpu_custom_call.1} parent=0 // pred_check
    _
  $region3: #{tpu_custom_call.1} parent=0 // pred_check_branch
    %15 = sbr.rel (0) target = $region5
  $region4: #{tpu_custom_call.1} parent=0 // pred_region
    _
  $region5: #{tpu_custom_call.1} parent=0 // pred_fallthru
    _
  // Predicated region
  $region6: #{tpu_custom_call.1} parent=0 // pred_check
    _
  $region7: #{tpu_custom_call.1} parent=0 // pred_check_branch
    %17 = sbr.rel (0) target = $region9
  $region8: #{tpu_custom_call.1} parent=0 // pred_region
    _
  $region9: #{tpu_custom_call.1} parent=0 // pred_fallthru
    _
  // Predicated region
  $region10: #{tpu_custom_call.1} parent=0 // pred_check
    _
  $region11: #{tpu_custom_call.1} parent=0 // pred_check_branch
    %19 = sbr.rel (0) target = $region13
  $region12: #{tpu_custom_call.1} parent=0 // pred_region
    _
  $region13: #{tpu_custom_call.1} parent=0 // pred_fallthru
    _
  // Predicated region
  $region14: #{tpu_custom_call.1} parent=0 // pred_check
    _
  $region15: #{tpu_custom_call.1} parent=0 // pred_check_branch
    %21 = sbr.rel (0) target = $region17
  $region16: #{tpu_custom_call.1} parent=0 // pred_region
    _
  $region17: #{tpu_custom_call.1} parent=0 // pred_fallthru
    _
  // Predicated region
  $region18: #{tpu_custom_call.1} parent=0 // pred_check
    _
  $region19: #{tpu_custom_call.1} parent=0 // pred_check_branch
    %23 = sbr.rel (0) target = $region21
  $region20: #{tpu_custom_call.1} parent=0 // pred_region
    _
  $region21: #{tpu_custom_call.1} parent=0 // pred_fallthru
    _
  // Predicated region
  $region22: #{tpu_custom_call.1} parent=0 // pred_check
    _
  $region23: #{tpu_custom_call.1} parent=0 // pred_check_branch
    %25 = sbr.rel (0) target = $region25
  $region24: #{tpu_custom_call.1} parent=0 // pred_region
    _
  $region25: #{tpu_custom_call.1} parent=0 // pred_fallthru
    _
  // Predicated region
  $region26: #{tpu_custom_call.1} parent=0 // pred_check
    _
  $region27: #{tpu_custom_call.1} parent=0 // pred_check_branch
    %27 = sbr.rel (0) target = $region29
  $region28: #{tpu_custom_call.1} parent=0 // pred_region
    _
  $region29: #{tpu_custom_call.1} parent=0 // pred_fallthru
    _
  %v28 = vld [vmem:[%s0] sm:$0xff]
  %v29 = vld [vmem:[%s0 + $0x8] sm:$0xff]
  %v30 = vld [vmem:[%s0 + $0x10] sm:$0xff]
  %v31 = vld [vmem:[%s0 + $0x18] sm:$0xff]
  %v32 = vld [vmem:[%s1] sm:$0x3]
  %34 = vset.pattern.permute.xlu0 0
  %35 = vperm.xlu0 %34, %v28
  %v36 = vpop.permute.xlu0 %35
  %39 = vset.pattern.permute.xlu0 0
  %40 = vperm.xlu0 %39, %v29
  %v41 = vpop.permute.xlu0 %40
  %44 = vset.pattern.permute.xlu0 0
  %45 = vperm.xlu0 %44, %v30
  %v46 = vpop.permute.xlu0 %45
  %49 = vset.pattern.permute.xlu0 0
  %50 = vperm.xlu0 %49, %v31
  %v51 = vpop.permute.xlu0 %50
  %v53 = vlaneseq
  %v54 = vshrl.u32 %v53, 7
  %v55 = vsub.s32 0, %v54
  %v56 = vrot.slane %v32, %v55
  %v57 = vmul.f32 %v36, %v56
  %v58 = vmul.f32 %v41, %v56
  %v59 = vmul.f32 %v46, %v56
  %v60 = vmul.f32 %v51, %v56
  %61 = vset.pattern.permute.xlu0 1
  %62 = vperm.xlu0 %61, %v28
  %v63 = vpop.permute.xlu0 %62
  %65 = vset.pattern.permute.xlu0 1
  %66 = vperm.xlu0 %65, %v29
  %v67 = vpop.permute.xlu0 %66
  %69 = vset.pattern.permute.xlu0 1
  %70 = vperm.xlu0 %69, %v30
  %v71 = vpop.permute.xlu0 %70
  %73 = vset.pattern.permute.xlu0 1
  %74 = vperm.xlu0 %73, %v31
  %v75 = vpop.permute.xlu0 %74
  %v77 = vlaneseq
  %v78 = vshrl.u32 %v77, 7
  %v79 = vsub.s32 1, %v78
  %v80 = vrot.slane %v32, %v79
  %v81 = vmul.f32 %v63, %v80
  %v82 = vmul.f32 %v67, %v80
  %v83 = vmul.f32 %v71, %v80
  %v84 = vmul.f32 %v75, %v80
  %v85 = vadd.f32 %v57, %v81
  %v86 = vadd.f32 %v58, %v82
  %v87 = vadd.f32 %v59, %v83
  %v88 = vadd.f32 %v60, %v84
  %v89 = vld [vmem:[%s2] sm:$0x1]
  %v91 = vlaneseq
  %v92 = vshrl.u32 %v91, 7
  %v93 = vsub.s32 0, %v92
  %v94 = vrot.slane %v89, %v93
  %v96 = vadd.f32 %v85, %v94
  %v97 = vadd.f32 %v86, %v94
  %v98 = vadd.f32 %v87, %v94
  %v99 = vadd.f32 %v88, %v94
  %v100 = vmax.f32 %v96, 0.0
  %v101 = vmax.f32 %v97, 0.0
  %v102 = vmax.f32 %v98, 0.0
  %v103 = vmax.f32 %v99, 0.0
  %v104 = vld [vmem:[%s3] sm:$0xff]
  %v105 = vld [vmem:[%s3 + $0x8] sm:$0xff]
  %v106 = vld [vmem:[%s3 + $0x10] sm:$0xff]
  %v107 = vld [vmem:[%s3 + $0x18] sm:$0xff]
  %v108 = vld [vmem:[%s4] sm:$0x1]
  %v110 = vlaneseq
  %v111 = vshrl.u32 %v110, 7
  %v112 = vsub.s32 0, %v111
  %v113 = vrot.slane %v108, %v112
  %vm115 = vcmask 261120
  %v117 = vsel %vm115, %v100, 0
  %v120 = vsel %vm115, %v101, 0
  %v123 = vsel %vm115, %v102, 0
  %v126 = vsel %vm115, %v103, 0
  %128 = vmatprep.subr.mxu0 0.0
  %129 = vmatpush1.msra.mxu0 0.0
  %130 = vmatprep.subr.mxu0 0.0
  %131 = vmatpush1.msra.mxu0 0.0
  %132 = vmatprep.subr.mxu0 0.0
  %133 = vmatpush1.msra.mxu0 0.0
  %134 = vmatprep.subr.mxu0 0.0
  %135 = vmatpush1.msra.mxu0 0.0
  %136 = vmatprep.subr.mxu0 0.0
  %137 = vmatpush1.msra.mxu0 0.0
  %138 = vmatprep.subr.mxu0 0.0
  %139 = vmatpush1.msra.mxu0 0.0
  %140 = vmatprep.subr.mxu0 0.0
  %141 = vmatpush1.msra.mxu0 0.0
  %142 = vmatprep.subr.mxu0 0.0
  %143 = vmatpush1.msra.mxu0 0.0
  %144 = vmatprep.subr.mxu0 0.0
  %145 = vmatpush1.msra.mxu0 0.0
  %146 = vmatprep.subr.mxu0 0.0
  %147 = vmatpush1.msra.mxu0 0.0
  %148 = vmatprep.subr.mxu0 0.0
  %149 = vmatpush1.msra.mxu0 0.0
  %150 = vmatprep.subr.mxu0 0.0
  %151 = vmatpush1.msra.mxu0 0.0
  %152 = vmatprep.subr.mxu0 0.0
  %153 = vmatpush1.msra.mxu0 %v107
  %154 = vmatprep.subr.mxu0 0.0
  %155 = vmatpush1.msra.mxu0 %v106
  %156 = vmatprep.subr.mxu0 0.0
  %157 = vmatpush1.msra.mxu0 %v105
  %158 = vmatprep.subr.mxu0 0.0
  %159 = vmatpush1.msra.mxu0 %v104
  %160 = vmatprep.subr.mxu0 0.0
  %161 = vmatpush2.msra.mxu0 0.0
  %162 = vmatprep.subr.mxu0 0.0
  %163 = vmatpush2.msra.mxu0 0.0
  %164 = vmatprep.subr.mxu0 0.0
  %165 = vmatpush2.msra.mxu0 0.0
  %166 = vmatprep.subr.mxu0 0.0
  %167 = vmatpush2.msra.mxu0 0.0
  %168 = vmatprep.subr.mxu0 0.0
  %169 = vmatpush2.msra.mxu0 0.0
  %170 = vmatprep.subr.mxu0 0.0
  %171 = vmatpush2.msra.mxu0 0.0
  %172 = vmatprep.subr.mxu0 0.0
  %173 = vmatpush2.msra.mxu0 0.0
  %174 = vmatprep.subr.mxu0 0.0
  %175 = vmatpush2.msra.mxu0 0.0
  %176 = vmatprep.subr.mxu0 0.0
  %177 = vmatpush2.msra.mxu0 0.0
  %178 = vmatprep.subr.mxu0 0.0
  %179 = vmatpush2.msra.mxu0 0.0
  %180 = vmatprep.subr.mxu0 0.0
  %181 = vmatpush2.msra.mxu0 0.0
  %182 = vmatprep.subr.mxu0 0.0
  %183 = vmatpush2.msra.mxu0 0.0
  %184 = vmatprep.subr.mxu0 0.0
  %185 = vmatpush2.msra.mxu0 0.0
  %186 = vmatprep.subr.mxu0 0.0
  %187 = vmatpush2.msra.mxu0 0.0
  %188 = vmatprep.subr.mxu0 0.0
  %189 = vmatpush2.msra.mxu0 0.0
  %190 = vmatprep.subr.mxu0 0.0
  %191 = vmatpush2.msra.mxu0 0.0
  %192 = vmatprep.mubr.f32.mxu0 0.0
  %193 = vmatmul.mubr.f32.gmra.mxu0 %v117
  %v194 = vpop.f32.mrf.mxu0
  %v195 = vadd.f32 %v113, %v194
  %v196 = vpop.f32.mrf.mxu0
  %197 = vmatprep.mubr.f32.mxu0 0.0
  %198 = vmatmul.mubr.f32.gmra.mxu0 %v120
  %v199 = vpop.f32.mrf.mxu0
  %v200 = vadd.f32 %v113, %v199
  %v201 = vpop.f32.mrf.mxu0
  %202 = vmatprep.mubr.f32.mxu0 0.0
  %203 = vmatmul.mubr.f32.gmra.mxu0 %v123
  %v204 = vpop.f32.mrf.mxu0
  %v205 = vadd.f32 %v113, %v204
  %v206 = vpop.f32.mrf.mxu0
  %207 = vmatprep.mubr.f32.mxu0 0.0
  %208 = vmatmul.mubr.f32.gmra.mxu0 %v126
  %v209 = vpop.f32.mrf.mxu0
  %v210 = vadd.f32 %v113, %v209
  %v211 = vpop.f32.mrf.mxu0
  %212 = vdwg.mxu0
  %v213 = vtanh.pop %v195
  %v214 = vtanh.pop %v200
  %v215 = vtanh.pop %v205
  %v216 = vtanh.pop %v210
  %v217 = vld [vmem:[%s5] sm:$0x1]
  %v219 = vlaneseq
  %v220 = vshrl.u32 %v219, 7
  %v221 = vsub.s32 0, %v220
  %v222 = vrot.slane %v217, %v221
  %v224 = vmul.f32 %v213, %v222
  %v225 = vmul.f32 %v214, %v222
  %v226 = vmul.f32 %v215, %v222
  %v227 = vmul.f32 %v216, %v222
  %v228 = vsel %vm115, %v224, 0.0
  %229 = vadd.xlane.f32.xlu0 %v228
  %v230 = vpop.xlane.xlu0 %229
  %v231 = vsel %vm115, %v225, 0.0
  %232 = vadd.xlane.f32.xlu0 %v231
  %v233 = vpop.xlane.xlu0 %232
  %v234 = vsel %vm115, %v226, 0.0
  %235 = vadd.xlane.f32.xlu0 %v234
  %v236 = vpop.xlane.xlu0 %235
  %v237 = vsel %vm115, %v227, 0.0
  %238 = vadd.xlane.f32.xlu0 %v237
  %v239 = vpop.xlane.xlu0 %238
  %v240 = vld [vmem:[#allocation2] sm:$0x1]
  %v242 = vlaneseq
  %v243 = vshrl.u32 %v242, 7
  %v244 = vsub.s32 0, %v243
  %v245 = vrot.slane %v240, %v244
  %v247 = vadd.f32 %v230, %v245
  %v248 = vadd.f32 %v233, %v245
  %v249 = vadd.f32 %v236, %v245
  %v250 = vadd.f32 %v239, %v245
  %v251 = vsub.f32 0.0, %v247
  %v252 = vsub.f32 0.0, %v248
  %v253 = vsub.f32 0.0, %v249
  %v254 = vsub.f32 0.0, %v250
  %v255 = vmul.f32 %v251, 1.442695
  %v256 = vpow.pop %v255
  %v257 = vmul.f32 %v252, 1.442695
  %v258 = vpow.pop %v257
  %v259 = vmul.f32 %v253, 1.442695
  %v260 = vpow.pop %v259
  %v261 = vmul.f32 %v254, 1.442695
  %v262 = vpow.pop %v261
  %v263 = vadd.f32 %v256, 1.0
  %v264 = vadd.f32 %v258, 1.0
  %v265 = vadd.f32 %v260, 1.0
  %v266 = vadd.f32 %v262, 1.0
  %v267 = vrcp.pop %v263
  %v268 = vmul.f32 1.0, %v267
  %v269 = vrcp.pop %v264
  %v270 = vmul.f32 1.0, %v269
  %v271 = vrcp.pop %v265
  %v272 = vmul.f32 1.0, %v271
  %v273 = vrcp.pop %v266
  %v274 = vmul.f32 1.0, %v273
  %v275 = vsub.f32 1.0, %v268
  %v276 = vsub.f32 1.0, %v270
  %v277 = vsub.f32 1.0, %v272
  %v278 = vsub.f32 1.0, %v274
  %vm279 = vcmask 7168
  %280 = vst.msk [vmem:[%s7] sm:$0xff] %vm279, %v275
  %281 = vst.msk [vmem:[%s7 + $0x8] sm:$0xff] %vm279, %v276
  %282 = vst.msk [vmem:[%s7 + $0x10] sm:$0xff] %vm279, %v277
  %283 = vst.msk [vmem:[%s7 + $0x18] sm:$0xff] %vm279, %v278
  %288 = vrot.lane.b32.xlu0 %v268, 1
  %v289 = vpop.permute.xlu0 %288
  %290 = vrot.lane.b32.xlu0 %v270, 1
  %v291 = vpop.permute.xlu0 %290
  %292 = vrot.lane.b32.xlu0 %v272, 1
  %v293 = vpop.permute.xlu0 %292
  %294 = vrot.lane.b32.xlu0 %v274, 1
  %v295 = vpop.permute.xlu0 %294
  %vm300 = vcmask 15368
  %301 = vst.msk [vmem:[%s7] sm:$0xff] %vm300, %v289
  %302 = vst.msk [vmem:[%s7 + $0x8] sm:$0xff] %vm300, %v291
  %303 = vst.msk [vmem:[%s7 + $0x10] sm:$0xff] %vm300, %v293
  %304 = vst.msk [vmem:[%s7 + $0x18] sm:$0xff] %vm300, %v295
  // Predicated region
  $region30: #{tpu_custom_call.1} parent=0 // pred_check
    _
  $region31: #{tpu_custom_call.1} parent=0 // pred_check_branch
    %306 = sbr.rel (0) target = $region33
  $region32: #{tpu_custom_call.1} parent=0 // pred_region
    _
  $region33: #{tpu_custom_call.1} parent=0 // pred_fallthru
    _
  // Predicated region
  $region34: #{tpu_custom_call.1} parent=0 // pred_check
    _
  $region35: #{tpu_custom_call.1} parent=0 // pred_check_branch
    %308 = sbr.rel (0) target = $region37
  $region36: #{tpu_custom_call.1} parent=0 // pred_region
    _
  $region37: #{tpu_custom_call.1} parent=0 // pred_fallthru
    _

</llo_original>
